<compile_context>
chip_gen: v5e
topology: v5e:2x2
jax: 0.10.0
libtpu: 0.0.40
codegen_flags: <defaults>
</compile_context>

<pallas_src>
import functools

import jax
import jax.numpy as jnp
from jax.experimental import pallas as pl
from jax.experimental.pallas import tpu as pltpu


def _round_up(x, m):
    return (x + m - 1) // m * m


def _cdiv(a, b):
    return -(-a // b)


def _kp_decoder_kernel(scalars_ref,   # SMEM (3,): [log_scale, AFT_dist_alpha, probs_dist_alpha]
                       inp_ref,       # VMEM (Bt, Pp, Ep1) f32   [graph_mean ; capacity], zero padded
                       cur_dist_ref,  # VMEM (Bt, Pp, Np)  f32
                       ninf_ref,      # VMEM (Bt, Pp, Np)  f32   (-inf on padded node columns)
                       enc_ref,       # VMEM (Bt, Nk, Ep)  bf16  encoded nodes, zero padded
                       wq_ref,        # VMEM (Ep1, Ep)     bf16  Wq_last^T, zero padded
                       wkv_ref,       # VMEM (Ep, 2Ep)     bf16  [Wk^T | Wv^T], zero padded
                       probs_ref,     # VMEM (Bt, Pp, Np)  f32
                       *, inv_sqrt_embedding_dim, logit_clipping, e_pad, n_k_pad):
    log_scale = scalars_ref[0]
    aft_alpha = scalars_ref[1]
    probs_alpha = scalars_ref[2]

    bt, pp, ep1 = inp_ref.shape
    np_pad = cur_dist_ref.shape[2]
    nk = n_k_pad
    ep = e_pad

    cur_dist = cur_dist_ref[...]                    # (Bt, Pp, Np) f32
    ninf_mask = ninf_ref[...]                       # (Bt, Pp, Np) f32
    enc = enc_ref[...]                              # (Bt, Nk, Ep) bf16

    # q_last = Wq_last([graph_mean ; capacity]) — one (Bt*Pp, Ep1) MXU pass,
    # bf16 operands, f32 accumulation.
    inp2d = inp_ref[...].reshape(bt * pp, ep1).astype(jnp.bfloat16)
    q = jnp.dot(inp2d, wq_ref[...], preferred_element_type=jnp.float32)   # (Bt*Pp, Ep)
    sigmoid_q = jax.nn.sigmoid(q).reshape(bt, pp, ep)                     # f32

    # set_kv fused: [k | v] = enc @ [Wk^T | Wv^T]  — single MXU weight load.
    enc2d = enc.reshape(bt * nk, ep)
    kv = jnp.dot(enc2d, wkv_ref[...], preferred_element_type=jnp.float32)  # (Bt*Nk, 2Ep)
    kv = kv.reshape(bt, nk, 2 * ep)
    k = kv[..., :ep]
    v = kv[..., ep:]
    exp_k = jnp.exp(k)                                                    # f32, only real node rows

    # AFT attention weights over real node columns only (padded cols N..Nk are
    # -inf in the mask, so exp() makes them 0).
    cur_nk = cur_dist[..., :nk]
    ninf_nk = ninf_mask[..., :nk]
    exp_a = jnp.exp(log_scale * aft_alpha * cur_nk + ninf_nk)             # (Bt, Pp, Nk)
    exp_a_b = exp_a.astype(jnp.bfloat16)

    bias = jnp.einsum('bpn,bne->bpe', exp_a_b, (exp_k * v).astype(jnp.bfloat16),
                      preferred_element_type=jnp.float32)                 # (Bt, Pp, Ep)
    denom = jnp.einsum('bpn,bne->bpe', exp_a_b, exp_k.astype(jnp.bfloat16),
                       preferred_element_type=jnp.float32)                # (Bt, Pp, Ep)

    inv_denom = pl.reciprocal(denom, approx=True)
    # TODO(synk): torch switches the whole tensor to a nan_to_num path if ANY
    # element is NaN; here we use a per-element zero-fallback for denom==0
    # (identical on NaN-free inputs; fully-masked rows still end up NaN after
    # +ninf_mask, matching torch).
    weighted = jnp.where(denom == 0.0, 0.0, bias * inv_denom)

    aft_out = sigmoid_q * weighted                                        # (Bt, Pp, Ep)

    # score = AFT_out @ encoded_nodes^T over the real (Nk) node rows, then pad
    # to the lane-dense Np node axis (padded columns are masked to -inf below).
    score_nk = jnp.einsum('bpe,bne->bpn', aft_out.astype(jnp.bfloat16), enc,
                          preferred_element_type=jnp.float32)             # (Bt, Pp, Nk)
    if nk < np_pad:
        score = jnp.concatenate(
            [score_nk, jnp.zeros((bt, pp, np_pad - nk), jnp.float32)], axis=-1)
    else:
        score = score_nk

    score_scaled = score * inv_sqrt_embedding_dim \
        + (log_scale * probs_alpha) * cur_dist
    score_clipped = logit_clipping * jnp.tanh(score_scaled)
    score_masked = score_clipped + ninf_mask

    # softmax over the lane-dense node axis; padded columns are -inf -> prob 0.
    m = jnp.max(score_masked, axis=-1, keepdims=True)
    e = jnp.exp(score_masked - m)
    s = jnp.sum(e, axis=-1, keepdims=True)
    probs_ref[...] = (e / s).astype(probs_ref.dtype)      # exact normalize: rows sum to 1


def prepare_kp_decoder_params(params):
    """Hoisted, once-per-model weight prep: pad/transpose/fuse and cast to bf16."""
    E = params['Wk'].shape[0]
    Ep = _round_up(E, 128)
    Ep1 = _round_up(E + 1, 128)
    bf16 = jnp.bfloat16

    wq_t = jnp.zeros((Ep1, Ep), bf16).at[:E + 1, :E].set(
        params['Wq_last'].T.astype(bf16))
    wkv_t = jnp.zeros((Ep, 2 * Ep), bf16)
    wkv_t = wkv_t.at[:E, :E].set(params['Wk'].T.astype(bf16))
    wkv_t = wkv_t.at[:E, Ep:Ep + E].set(params['Wv'].T.astype(bf16))

    return {
        'wq_t': wq_t,
        'wkv_t': wkv_t,
        'AFT_dist_alpha': jnp.asarray(params['AFT_dist_alpha'], jnp.float32).reshape(()),
        'probs_dist_alpha': jnp.asarray(params['probs_dist_alpha'], jnp.float32).reshape(()),
        'embedding_dim': E,
    }


def kp_decoder_forward(prepared, encoded_nodes, encoded_graph_mean_pomo, capacity,
                       cur_dist, log_scale, ninf_mask,
                       *, sqrt_embedding_dim, logit_clipping, block_b=32):
    B, P, E = encoded_graph_mean_pomo.shape
    N = encoded_nodes.shape[1]
    assert E == prepared['embedding_dim']
    f32 = jnp.float32
    bf16 = jnp.bfloat16

    Ep = _round_up(E, 128)           # padded embedding dim (lane-dense)
    Ep1 = _round_up(E + 1, 128)      # padded embedding_dim + 1
    Nk = _round_up(N, 16)            # node rows of encoded_nodes: bf16 sublane pad only
    Np = _round_up(N, 128)           # lane-dense node axis for masks / probs output
    Pp = _round_up(P, 8)             # sublane-friendly pomo dim

    # Batch tile: big enough to amortize grid overhead / fill the MXU M dim,
    # but always leaving >=2 grid steps when B>=2 (v7x has 2 TensorCores).
    bt = max(1, min(block_b, B))
    if B >= 2:
        while bt > 1 and _cdiv(B, bt) < 2:
            bt = _cdiv(bt, 2)
    Bp = _round_up(B, bt)

    # ---- plain-JAX glue: per-call input padding / concat (input-dependent) ----
    inp_cat = jnp.zeros((Bp, Pp, Ep1), f32)          # kept f32 (tiny stream, 8-row sublane tile)
    inp_cat = inp_cat.at[:B, :P, :E].set(encoded_graph_mean_pomo.astype(f32))
    inp_cat = inp_cat.at[:B, :P, E].set(capacity.astype(f32))

    enc_p = jnp.zeros((Bp, Nk, Ep), bf16).at[:B, :N, :E].set(encoded_nodes.astype(bf16))
    cur_p = jnp.zeros((Bp, Pp, Np), f32).at[:B, :P, :N].set(cur_dist.astype(f32))

    ninf_p = jnp.full((Bp, Pp, Np), -jnp.inf, f32)   # padded node columns -> -inf
    ninf_p = ninf_p.at[:, :, :N].set(0.0)
    ninf_p = ninf_p.at[:B, :P, :N].set(ninf_mask.astype(f32))

    scalars = jnp.stack([
        jnp.asarray(log_scale, f32).reshape(()),
        prepared['AFT_dist_alpha'],
        prepared['probs_dist_alpha'],
    ])

    kernel = functools.partial(
        _kp_decoder_kernel,
        inv_sqrt_embedding_dim=1.0 / float(sqrt_embedding_dim),
        logit_clipping=float(logit_clipping),
        e_pad=Ep, n_k_pad=Nk)

    probs_p = pl.pallas_call(
        kernel,
        out_shape=jax.ShapeDtypeStruct((Bp, Pp, Np), jnp.float32),
        grid=(Bp // bt,),
        in_specs=[
            pl.BlockSpec(memory_space=pltpu.MemorySpace.SMEM),            # scalars
            pl.BlockSpec((bt, Pp, Ep1), lambda b: (b, 0, 0)),             # [gm ; cap]   f32
            pl.BlockSpec((bt, Pp, Np), lambda b: (b, 0, 0)),              # cur_dist     f32
            pl.BlockSpec((bt, Pp, Np), lambda b: (b, 0, 0)),              # ninf_mask    f32
            pl.BlockSpec((bt, Nk, Ep), lambda b: (b, 0, 0)),              # encoded nodes bf16
            pl.BlockSpec((Ep1, Ep), lambda b: (0, 0)),                    # Wq_last^T    bf16
            pl.BlockSpec((Ep, 2 * Ep), lambda b: (0, 0)),                 # [Wk^T|Wv^T]  bf16
        ],
        out_specs=pl.BlockSpec((bt, Pp, Np), lambda b: (b, 0, 0)),
        compiler_params=pltpu.CompilerParams(
            dimension_semantics=("parallel",),
            # 48 MiB fits comfortably under v7x's 64 MiB physical VMEM; on
            # v5e/v6e (128 MiB) this can be raised further with a larger block_b.
            vmem_limit_bytes=48 * 1024 * 1024),
    )(scalars, inp_cat, cur_p, ninf_p, enc_p, prepared['wq_t'], prepared['wkv_t'])

    if (Bp, Pp, Np) != (B, P, N):
        probs_p = probs_p[:B, :P, :N]
    return probs_p


def kp_decoder_ref(params, encoded_nodes, egm, capacity, cur_dist, log_scale, ninf_mask,
                   *, sqrt_embedding_dim, logit_clipping):
    """Pure-JAX f32 reference mirroring the PyTorch forward, for validation."""
    k = encoded_nodes @ params['Wk'].T
    v = encoded_nodes @ params['Wv'].T
    single_head_key = jnp.swapaxes(encoded_nodes, 1, 2)
    inp = jnp.concatenate([egm, capacity[:, :, None]], axis=2)
    q = inp @ params['Wq_last'].T
    sig_q = jax.nn.sigmoid(q)
    a = log_scale * params['AFT_dist_alpha'] * cur_dist + ninf_mask
    bias = jnp.exp(a) @ (jnp.exp(k) * v)
    denom = jnp.exp(a) @ jnp.exp(k)
    weighted = bias / denom
    weighted = jnp.where(jnp.any(jnp.isnan(weighted)),
                         jnp.nan_to_num(bias) / jnp.nan_to_num(denom), weighted)
    aft = sig_q * weighted
    score = aft @ single_head_key
    score = score / sqrt_embedding_dim + log_scale * params['probs_dist_alpha'] * cur_dist
    score = logit_clipping * jnp.tanh(score)
    score = score + ninf_mask
    return jax.nn.softmax(score, axis=2)


if __name__ == "__main__":
    B, P, N, E = 2, 8, 16, 32          # batch, pomo, problem(nodes), embedding_dim
    sqrt_embedding_dim = float(E) ** 0.5
    logit_clipping = 10.0
    alpha_default = 1.0
    log_scale = 0.5

    key = jax.random.PRNGKey(0)
    keys = jax.random.split(key, 8)

    params = {
        # nn.Linear weights are (out_features, in_features), bias=False
        'Wq_last': 0.1 * jax.random.normal(keys[0], (E, E + 1), jnp.float32),
        'Wk': 0.1 * jax.random.normal(keys[1], (E, E), jnp.float32),
        'Wv': 0.1 * jax.random.normal(keys[2], (E, E), jnp.float32),
        'AFT_dist_alpha': jnp.float32(alpha_default),
        'probs_dist_alpha': jnp.float32(alpha_default),
    }

    encoded_nodes = jax.random.normal(keys[3], (B, N, E), jnp.float32)
    encoded_graph_mean_pomo = jax.random.normal(keys[4], (B, P, E), jnp.float32)
    capacity = jax.random.uniform(keys[5], (B, P), dtype=jnp.float32)
    cur_dist = jax.random.uniform(keys[6], (B, P, N), dtype=jnp.float32)
    mask_rand = jax.random.uniform(keys[7], (B, P, N))
    ninf_mask = jnp.where(mask_rand < 0.2, -jnp.inf, 0.0).astype(jnp.float32)
    ninf_mask = ninf_mask.at[:, :, 0].set(0.0)   # keep at least one valid node per row

    # Once-per-model weight prep (hoisted out of the per-call path).
    prepared = prepare_kp_decoder_params(params)

    probs = kp_decoder_forward(
        prepared, encoded_nodes, encoded_graph_mean_pomo, capacity,
        cur_dist, log_scale, ninf_mask,
        sqrt_embedding_dim=sqrt_embedding_dim, logit_clipping=logit_clipping)
    probs = jax.block_until_ready(probs)

    ref = kp_decoder_ref(
        params, encoded_nodes, encoded_graph_mean_pomo, capacity,
        cur_dist, log_scale, ninf_mask,
        sqrt_embedding_dim=sqrt_embedding_dim, logit_clipping=logit_clipping)

    assert probs.shape == (B, P, N)
    assert bool(jnp.all(jnp.isfinite(probs)))
    # Rows sum to 1 (exact divide in the final normalize).
    assert bool(jnp.allclose(jnp.sum(probs, axis=-1), 1.0, atol=1e-5))
    # Kernel uses bf16 MXU operands (f32 accumulation) + EUP approx reciprocal
    # for the AFT divide, so compare against the f32 reference at bf16 tolerance.
    assert bool(jnp.allclose(probs, ref, atol=2e-2, rtol=2e-2)), "mismatch vs reference"
    print("KERNEL_OK")
</pallas_src>

<mosaic_0001>
module attributes {stable_mosaic.version = 11 : i64} {
  func.func @_kp_decoder_kernel(%arg0: i32, %arg1: memref<3xf32, #tpu.memory_space<smem>>, %arg2: memref<1x8x128xf32, #tpu.memory_space<vmem>>, %arg3: memref<1x8x128xf32, #tpu.memory_space<vmem>>, %arg4: memref<1x8x128xf32, #tpu.memory_space<vmem>>, %arg5: memref<1x16x128xbf16, #tpu.memory_space<vmem>>, %arg6: memref<128x128xbf16, #tpu.memory_space<vmem>>, %arg7: memref<128x256xbf16, #tpu.memory_space<vmem>>, %arg8: memref<1x8x128xf32, #tpu.memory_space<vmem>>) attributes {dimension_semantics = [#tpu.dimension_semantics<parallel>], iteration_bounds = array<i64: 2>, scalar_prefetch = 0 : i64, scratch_operands = 0 : i64, tpu.core_type = #tpu.core_type<tc>, window_params = [{transform_indices = @transform_0, window_bounds = array<i64: 3>}, {transform_indices = @transform_1, window_bounds = array<i64: 1, 8, 128>}, {transform_indices = @transform_2, window_bounds = array<i64: 1, 8, 128>}, {transform_indices = @transform_3, window_bounds = array<i64: 1, 8, 128>}, {transform_indices = @transform_4, window_bounds = array<i64: 1, 16, 128>}, {pipeline_mode = #tpu.pipeline_mode<synchronous>, transform_indices = @transform_5, window_bounds = array<i64: 128, 128>}, {pipeline_mode = #tpu.pipeline_mode<synchronous>, transform_indices = @transform_6, window_bounds = array<i64: 128, 256>}, {transform_indices = @transform_7, window_bounds = array<i64: 1, 8, 128>}]} {
    %c0 = arith.constant 0 : index
    %0 = memref.load %arg1[%c0] : memref<3xf32, #tpu.memory_space<smem>>
    %c1 = arith.constant 1 : index
    %1 = memref.load %arg1[%c1] : memref<3xf32, #tpu.memory_space<smem>>
    %c2 = arith.constant 2 : index
    %2 = memref.load %arg1[%c2] : memref<3xf32, #tpu.memory_space<smem>>
    %c0_0 = arith.constant 0 : index
    %c0_1 = arith.constant 0 : index
    %c0_2 = arith.constant 0 : index
    %3 = vector.load %arg3[%c0_0, %c0_1, %c0_2] : memref<1x8x128xf32, #tpu.memory_space<vmem>>, vector<1x8x128xf32>
    %c0_3 = arith.constant 0 : index
    %c0_4 = arith.constant 0 : index
    %c0_5 = arith.constant 0 : index
    %4 = vector.load %arg4[%c0_3, %c0_4, %c0_5] : memref<1x8x128xf32, #tpu.memory_space<vmem>>, vector<1x8x128xf32>
    %c0_6 = arith.constant 0 : index
    %c0_7 = arith.constant 0 : index
    %c0_8 = arith.constant 0 : index
    %5 = vector.load %arg5[%c0_6, %c0_7, %c0_8] : memref<1x16x128xbf16, #tpu.memory_space<vmem>>, vector<1x16x128xbf16>
    %c0_9 = arith.constant 0 : index
    %c0_10 = arith.constant 0 : index
    %c0_11 = arith.constant 0 : index
    %6 = vector.load %arg2[%c0_9, %c0_10, %c0_11] : memref<1x8x128xf32, #tpu.memory_space<vmem>>, vector<1x8x128xf32>
    %7 = vector.shape_cast %6 : vector<1x8x128xf32> to vector<8x128xf32>
    %8 = arith.truncf %7 : vector<8x128xf32> to vector<8x128xbf16>
    %c0_12 = arith.constant 0 : index
    %c0_13 = arith.constant 0 : index
    %9 = vector.load %arg6[%c0_12, %c0_13] : memref<128x128xbf16, #tpu.memory_space<vmem>>, vector<128x128xbf16>
    %cst = arith.constant dense<0.000000e+00> : vector<8x128xf32>
    %10 = tpu.matmul %8, %9, %cst {dimension_numbers = #tpu.dot_dimension_numbers<[1], [0], [0], [1], [0, 0, 1, 1], [], []>} : vector<8x128xbf16>, vector<128x128xbf16>, vector<8x128xf32> -> vector<8x128xf32>
    %11 = arith.negf %10 : vector<8x128xf32>
    %12 = math.exp %11 : vector<8x128xf32>
    %cst_14 = arith.constant 1.000000e+00 : f32
    %13 = vector.broadcast %cst_14 : f32 to vector<8x128xf32>
    %14 = arith.addf %13, %12 : vector<8x128xf32>
    %15 = arith.divf %13, %14 : vector<8x128xf32>
    %16 = vector.shape_cast %15 : vector<8x128xf32> to vector<1x8x128xf32>
    %17 = vector.shape_cast %5 : vector<1x16x128xbf16> to vector<16x128xbf16>
    %c0_15 = arith.constant 0 : index
    %c0_16 = arith.constant 0 : index
    %18 = vector.load %arg7[%c0_15, %c0_16] : memref<128x256xbf16, #tpu.memory_space<vmem>>, vector<128x256xbf16>
    %cst_17 = arith.constant dense<0.000000e+00> : vector<16x256xf32>
    %19 = tpu.matmul %17, %18, %cst_17 {dimension_numbers = #tpu.dot_dimension_numbers<[1], [0], [0], [1], [0, 0, 1, 1], [], []>} : vector<16x128xbf16>, vector<128x256xbf16>, vector<16x256xf32> -> vector<16x256xf32>
    %20 = vector.shape_cast %19 : vector<16x256xf32> to vector<1x16x256xf32>
    %21 = vector.extract_strided_slice %20 {offsets = [0, 0, 0], sizes = [1, 16, 128], strides = [1, 1, 1]} : vector<1x16x256xf32> to vector<1x16x128xf32>
    %22 = vector.extract_strided_slice %20 {offsets = [0, 0, 128], sizes = [1, 16, 128], strides = [1, 1, 1]} : vector<1x16x256xf32> to vector<1x16x128xf32>
    %23 = math.exp %21 : vector<1x16x128xf32>
    %24 = vector.extract_strided_slice %3 {offsets = [0, 0, 0], sizes = [1, 8, 16], strides = [1, 1, 1]} : vector<1x8x128xf32> to vector<1x8x16xf32>
    %25 = vector.extract_strided_slice %4 {offsets = [0, 0, 0], sizes = [1, 8, 16], strides = [1, 1, 1]} : vector<1x8x128xf32> to vector<1x8x16xf32>
    %26 = arith.mulf %0, %1 : f32
    %27 = vector.broadcast %26 : f32 to vector<1x8x16xf32>
    %28 = arith.mulf %27, %24 : vector<1x8x16xf32>
    %29 = arith.addf %28, %25 : vector<1x8x16xf32>
    %30 = math.exp %29 : vector<1x8x16xf32>
    %31 = arith.truncf %30 : vector<1x8x16xf32> to vector<1x8x16xbf16>
    %32 = arith.mulf %23, %22 : vector<1x16x128xf32>
    %33 = arith.truncf %32 : vector<1x16x128xf32> to vector<1x16x128xbf16>
    "tpu.trace_start"() <{level = 10 : i32, message = "bpn,bne->bpe"}> : () -> ()
    %cst_18 = arith.constant dense<0.000000e+00> : vector<1x8x128xf32>
    %34 = tpu.matmul %31, %33, %cst_18 {dimension_numbers = #tpu.dot_dimension_numbers<[2], [1], [1], [2], [0, 0, 0, 1, 1, 2], [0], [0]>} : vector<1x8x16xbf16>, vector<1x16x128xbf16>, vector<1x8x128xf32> -> vector<1x8x128xf32>
    "tpu.trace_stop"() : () -> ()
    %35 = arith.truncf %23 : vector<1x16x128xf32> to vector<1x16x128xbf16>
    "tpu.trace_start"() <{level = 10 : i32, message = "bpn,bne->bpe"}> : () -> ()
    %cst_19 = arith.constant dense<0.000000e+00> : vector<1x8x128xf32>
    %36 = tpu.matmul %31, %35, %cst_19 {dimension_numbers = #tpu.dot_dimension_numbers<[2], [1], [1], [2], [0, 0, 0, 1, 1, 2], [0], [0]>} : vector<1x8x16xbf16>, vector<1x16x128xbf16>, vector<1x8x128xf32> -> vector<1x8x128xf32>
    "tpu.trace_stop"() : () -> ()
    %37 = tpu.reciprocal %36 {approx = true} : vector<1x8x128xf32> -> vector<1x8x128xf32>
    %cst_20 = arith.constant 0.000000e+00 : f32
    %38 = vector.broadcast %cst_20 : f32 to vector<1x8x128xf32>
    %39 = arith.cmpf oeq, %36, %38 : vector<1x8x128xf32>
    %40 = arith.mulf %34, %37 : vector<1x8x128xf32>
    %cst_21 = arith.constant 0.000000e+00 : f32
    %41 = vector.broadcast %cst_21 : f32 to vector<1x8x128xf32>
    %42 = arith.select %39, %41, %40 : vector<1x8x128xi1>, vector<1x8x128xf32>
    %43 = arith.mulf %16, %42 : vector<1x8x128xf32>
    %44 = arith.truncf %43 : vector<1x8x128xf32> to vector<1x8x128xbf16>
    "tpu.trace_start"() <{level = 10 : i32, message = "bpe,bne->bpn"}> : () -> ()
    %cst_22 = arith.constant dense<0.000000e+00> : vector<1x8x16xf32>
    %45 = tpu.matmul %44, %5, %cst_22 {dimension_numbers = #tpu.dot_dimension_numbers<[2], [2], [1], [1], [0, 0, 0, 1, 1, 1], [0], [0]>} : vector<1x8x128xbf16>, vector<1x16x128xbf16>, vector<1x8x16xf32> -> vector<1x8x16xf32>
    %cst_23 = arith.constant 0.000000e+00 : f32
    "tpu.trace_stop"() : () -> ()
    %46 = vector.broadcast %cst_23 : f32 to vector<1x8x112xf32>
    %47 = tpu.concatenate %45, %46 in 2 : vector<1x8x16xf32>, vector<1x8x112xf32> -> vector<1x8x128xf32>
    %cst_24 = arith.constant 0.176776692 : f32
    %48 = vector.broadcast %cst_24 : f32 to vector<1x8x128xf32>
    %49 = arith.mulf %47, %48 : vector<1x8x128xf32>
    %50 = arith.mulf %0, %2 : f32
    %51 = vector.broadcast %50 : f32 to vector<1x8x128xf32>
    %52 = arith.mulf %51, %3 : vector<1x8x128xf32>
    %53 = arith.addf %49, %52 : vector<1x8x128xf32>
    %54 = math.tanh %53 : vector<1x8x128xf32>
    %cst_25 = arith.constant 1.000000e+01 : f32
    %55 = vector.broadcast %cst_25 : f32 to vector<1x8x128xf32>
    %56 = arith.mulf %55, %54 : vector<1x8x128xf32>
    %57 = arith.addf %56, %4 : vector<1x8x128xf32>
    %cst_26 = arith.constant dense<0xFF800000> : vector<1x8xf32>
    %58 = vector.multi_reduction <maximumf>, %57, %cst_26 [2] : vector<1x8x128xf32> to vector<1x8xf32>
    %59 = vector.shape_cast %58 : vector<1x8xf32> to vector<1x8x1xf32>
    %60 = vector.broadcast %59 : vector<1x8x1xf32> to vector<1x8x128xf32>
    %61 = arith.subf %57, %60 : vector<1x8x128xf32>
    %62 = math.exp %61 : vector<1x8x128xf32>
    %cst_27 = arith.constant dense<0.000000e+00> : vector<1x8xf32>
    %63 = vector.multi_reduction <add>, %62, %cst_27 [2] : vector<1x8x128xf32> to vector<1x8xf32>
    %64 = vector.shape_cast %63 : vector<1x8xf32> to vector<1x8x1xf32>
    %65 = vector.broadcast %64 : vector<1x8x1xf32> to vector<1x8x128xf32>
    %66 = arith.divf %62, %65 : vector<1x8x128xf32>
    %c0_28 = arith.constant 0 : index
    %c0_29 = arith.constant 0 : index
    %c0_30 = arith.constant 0 : index
    %67 = vector.load %arg8[%c0_28, %c0_29, %c0_30] : memref<1x8x128xf32, #tpu.memory_space<vmem>>, vector<1x8x128xf32>
    tpu.vector_store %arg8[%c0_28, %c0_29, %c0_30], %66 {strides = array<i32>} : memref<1x8x128xf32, #tpu.memory_space<vmem>>, vector<1x8x128xf32>,
    return
  }
  func.func @transform_0(%arg0: i32) -> i32 {
    %c0_i32 = arith.constant 0 : i32
    %c0_i32_0 = arith.constant 0 : i32
    return %c0_i32 : i32
  }
  func.func @transform_1(%arg0: i32) -> (i32, i32, i32) {
    %c0_i32 = arith.constant 0 : i32
    %c0_i32_0 = arith.constant 0 : i32
    %c0_i32_1 = arith.constant 0 : i32
    return %arg0, %c0_i32, %c0_i32_0 : i32, i32, i32
  }
  func.func @transform_2(%arg0: i32) -> (i32, i32, i32) {
    %c0_i32 = arith.constant 0 : i32
    %c0_i32_0 = arith.constant 0 : i32
    %c0_i32_1 = arith.constant 0 : i32
    return %arg0, %c0_i32, %c0_i32_0 : i32, i32, i32
  }
  func.func @transform_3(%arg0: i32) -> (i32, i32, i32) {
    %c0_i32 = arith.constant 0 : i32
    %c0_i32_0 = arith.constant 0 : i32
    %c0_i32_1 = arith.constant 0 : i32
    return %arg0, %c0_i32, %c0_i32_0 : i32, i32, i32
  }
  func.func @transform_4(%arg0: i32) -> (i32, i32, i32) {
    %c0_i32 = arith.constant 0 : i32
    %c0_i32_0 = arith.constant 0 : i32
    %c0_i32_1 = arith.constant 0 : i32
    return %arg0, %c0_i32, %c0_i32_0 : i32, i32, i32
  }
  func.func @transform_5(%arg0: i32) -> (i32, i32) {
    %c0_i32 = arith.constant 0 : i32
    %c0_i32_0 = arith.constant 0 : i32
    %c0_i32_1 = arith.constant 0 : i32
    return %c0_i32, %c0_i32_0 : i32, i32
  }
  func.func @transform_6(%arg0: i32) -> (i32, i32) {
    %c0_i32 = arith.constant 0 : i32
    %c0_i32_0 = arith.constant 0 : i32
    %c0_i32_1 = arith.constant 0 : i32
    return %c0_i32, %c0_i32_0 : i32, i32
  }
  func.func @transform_7(%arg0: i32) -> (i32, i32, i32) {
    %c0_i32 = arith.constant 0 : i32
    %c0_i32_0 = arith.constant 0 : i32
    %c0_i32_1 = arith.constant 0 : i32
    return %arg0, %c0_i32, %c0_i32_0 : i32, i32, i32
  }
}

</mosaic_0001>

<llo_original>
// kernel: tpu_custom_call.1
$region0: #{tpu_custom_call.1}
  #allocation0 [shape = 'u32[]', space=smem, size = 0x4, offset = 0x4, fixed_abs, tag = 'smem constant byte address 0x4 - core index']
  #allocation1 [shape = 'u32[72,128]{1,0:T(1,128)}', space=vmem, size = 0x9000, scoped, tag = 'internal scratch']
  %s0 = inlined_call_operand.hbm [shape: f32[3], index: 0, kind: input, shape index: {}]
  %s1 = inlined_call_operand.hbm [shape: f32[2,8,128], index: 1, kind: input, shape index: {}]
  %s2 = inlined_call_operand.hbm [shape: f32[2,8,128], index: 2, kind: input, shape index: {}]
  %s3 = inlined_call_operand.hbm [shape: f32[2,8,128], index: 3, kind: input, shape index: {}]
  %s4 = inlined_call_operand.hbm [shape: bf16[2,16,128], index: 4, kind: input, shape index: {}]
  %s5 = inlined_call_operand.hbm [shape: bf16[128,128], index: 5, kind: input, shape index: {}]
  %s6 = inlined_call_operand.hbm [shape: bf16[128,256], index: 6, kind: input, shape index: {}]
  %s7 = inlined_call_operand.hbm [shape: f32[2,8,128], index: 7, kind: output, shape index: {}]
  %s8 = sld [smem:[#allocation0]]
  $region89: #{tpu_custom_call.1} parent=0
    _
  %s10 = ssub.s32 1, %s8
  %s11 = scalar_select 0, %s10, %s8
  $region1: #{tpu_custom_call.1} parent=0
    #allocation2 [shape = 'u8[512]{0}', space=smem, size = 0x200, scoped, tag = 'input window, operand 0, single buffered']
    #allocation3 [shape = 's32[2]{0}', space=sflag, size = 0x8, scoped, tag = 'scoped memory for tpu_custom_call.1']
    #allocation4 [shape = 's32[2]{0}', space=sflag, size = 0x8, scoped, tag = 'scoped memory for tpu_custom_call.1']
    #allocation5 [shape = 's32[2]{0}', space=sflag, size = 0x8, scoped, tag = 'scoped memory for tpu_custom_call.1']
    #allocation6 [shape = 'u8[8192]{0}', space=vmem, size = 0x2000, scoped, tag = 'input window, operand 1']
    #allocation7 [shape = 'u8[8192]{0}', space=vmem, size = 0x2000, scoped, tag = 'input window, operand 2']
    #allocation8 [shape = 's32[2]{0}', space=sflag, size = 0x8, scoped, tag = 'scoped memory for tpu_custom_call.1']
    #allocation9 [shape = 'u8[8192]{0}', space=vmem, size = 0x2000, scoped, tag = 'input window, operand 3']
    #allocation10 [shape = 'u8[8192]{0}', space=vmem, size = 0x2000, scoped, tag = 'input window, operand 4']
    #allocation11 [shape = 's32[2]{0}', space=sflag, size = 0x8, scoped, tag = 'scoped memory for tpu_custom_call.1']
    #allocation12 [shape = 'u8[32768]{0}', space=vmem, size = 0x8000, scoped, tag = 'input window, operand 5, single buffered']
    #allocation13 [shape = 'u8[65536]{0}', space=vmem, size = 0x10000, scoped, tag = 'input window, operand 6, single buffered']
    #allocation14 [shape = 's32[1]{0}', space=sflag, size = 0x4, scoped, tag = 'scoped memory for tpu_custom_call.1']
    #allocation15 [shape = 'u8[8192]{0}', space=vmem, size = 0x2000, scoped, tag = 'output window, operand 0']
    %12 = vsyncpa [#allocation5], 0
    %13 = vsyncpa [#allocation3], 0
    %s14 = scalar_lea.sflag [#allocation3], 1
    %15 = vsyncpa %s14, 0
    %16 = vsyncpa [#allocation8], 0
    %s17 = scalar_lea.sflag [#allocation8], 1
    %18 = vsyncpa %s17, 0
    %19 = vsyncpa [#allocation11], 0
    %s20 = scalar_lea.sflag [#allocation11], 1
    %21 = vsyncpa %s20, 0
    %22 = vsyncpa [#allocation14], 0
    %23 = vsyncpa [#allocation4], 0
    %s24 = scalar_lea.sflag [#allocation4], 1
    %25 = vsyncpa %s24, 0
    loop: start=0, step=1, limit=4
    $region2: #{tpu_custom_call.1} parent=1 // loop_pre_header
      _
    $region3: #{tpu_custom_call.1} parent=1 // loop_header
      %s27 = sphi 0, %s31
      %p28 = scmp.ge.s32.totalorder %s27, 4
      %s35 = sphi 0, %s35
      %s37 = sphi 0, %s35
      %s38 = sphi 0, %s37
      %s52 = sphi 0, %s38
      %s58 = sphi 0, %s60
      %s61 = sphi 0, %s58
      %s62 = sphi 0, %s61
      %s78 = sphi 0, %s62
      %s84 = sphi 0, %s86
      %s87 = sphi 0, %s84
      %s88 = sphi 0, %s87
      %s104 = sphi 0, %s88
      %s110 = sphi 0, %s112
      %s113 = sphi 0, %s110
      %s114 = sphi 0, %s113
      %s130 = sphi 0, %s114
      %s136 = sphi 0, %s138
      %s139 = sphi 0, %s136
      %s140 = sphi 0, %s139
      %s156 = sphi 0, %s140
      %s160 = sphi 0, %s160
      %s162 = sphi 0, %s160
      %s163 = sphi 0, %s162
      %s177 = sphi 0, %s163
      %s181 = sphi 0, %s181
      %s183 = sphi 0, %s181
      %s184 = sphi 0, %s183
      %s198 = sphi 0, %s184
      %s204 = sphi 0, %s206
      %s207 = sphi 0, %s204
      %s208 = sphi 0, %s207
      %s224 = sphi 0, %s208
    $region4: #{tpu_custom_call.1} parent=1 // loop_header_branch
      %30 = sbr.rel (%p28) target = $region8
    $region5: #{tpu_custom_call.1} parent=1 // loop_body
      %s32 = ssub.s32 %s27, 1
      %s33 = ssub.s32 %s27, 2
      %s34 = sadd.s32 %s27, 1
      %s36 = sadd.s32 %s35, 1
      %p39 = scmp.eq.s32.totalorder %s27, 1
      %p40 = scmp.ne.s32.totalorder %s35, %s37
      %p41 = scmp.eq.s32.totalorder %s27, 0
      %p42 = por %p40, %p41
      %p43 = scmp.ne.s32.totalorder %s35, %s37
      %p44 = scmp.eq.s32.totalorder %s32, 1
      %p45 = por %p43, %p44
      %p46 = scmp.ne.s32.totalorder %s37, %s38
      %p47 = scmp.eq.s32.totalorder %s32, 0
      %p48 = por %p46, %p47
      %p49 = scmp.ne.s32.totalorder %s37, %s38
      %p50 = scmp.eq.s32.totalorder %s33, 1
      %p51 = por %p49, %p50
      %p53 = scmp.ne.s32.totalorder %s38, %s52
      %p54 = scmp.eq.s32.totalorder %s33, 0
      %p55 = por %p53, %p54
      %s56 = ssub.s32 %s27, %s34
      %p57 = scmp.eq.s32.totalorder %s56, 0
      %s59 = sadd.s32 %s58, 1
      %s60 = scalar_select %p57, %s58, %s59
      %p63 = pneg %p57
      %p64 = scmp.eq.s32.totalorder %s27, 1
      %p65 = por %p63, %p64
      %p66 = scmp.ne.s32.totalorder %s58, %s61
      %p67 = scmp.eq.s32.totalorder %s27, 0
      %p68 = por %p66, %p67
      %p69 = scmp.ne.s32.totalorder %s58, %s61
      %p70 = scmp.eq.s32.totalorder %s32, 1
      %p71 = por %p69, %p70
      %p72 = scmp.ne.s32.totalorder %s61, %s62
      %p73 = scmp.eq.s32.totalorder %s32, 0
      %p74 = por %p72, %p73
      %p75 = scmp.ne.s32.totalorder %s61, %s62
      %p76 = scmp.eq.s32.totalorder %s33, 1
      %p77 = por %p75, %p76
      %p79 = scmp.ne.s32.totalorder %s62, %s78
      %p80 = scmp.eq.s32.totalorder %s33, 0
      %p81 = por %p79, %p80
      %s82 = ssub.s32 %s27, %s34
      %p83 = scmp.eq.s32.totalorder %s82, 0
      %s85 = sadd.s32 %s84, 1
      %s86 = scalar_select %p83, %s84, %s85
      %p89 = pneg %p83
      %p90 = scmp.eq.s32.totalorder %s27, 1
      %p91 = por %p89, %p90
      %p92 = scmp.ne.s32.totalorder %s84, %s87
      %p93 = scmp.eq.s32.totalorder %s27, 0
      %p94 = por %p92, %p93
      %p95 = scmp.ne.s32.totalorder %s84, %s87
      %p96 = scmp.eq.s32.totalorder %s32, 1
      %p97 = por %p95, %p96
      %p98 = scmp.ne.s32.totalorder %s87, %s88
      %p99 = scmp.eq.s32.totalorder %s32, 0
      %p100 = por %p98, %p99
      %p101 = scmp.ne.s32.totalorder %s87, %s88
      %p102 = scmp.eq.s32.totalorder %s33, 1
      %p103 = por %p101, %p102
      %p105 = scmp.ne.s32.totalorder %s88, %s104
      %p106 = scmp.eq.s32.totalorder %s33, 0
      %p107 = por %p105, %p106
      %s108 = ssub.s32 %s27, %s34
      %p109 = scmp.eq.s32.totalorder %s108, 0
      %s111 = sadd.s32 %s110, 1
      %s112 = scalar_select %p109, %s110, %s111
      %p115 = pneg %p109
      %p116 = scmp.eq.s32.totalorder %s27, 1
      %p117 = por %p115, %p116
      %p118 = scmp.ne.s32.totalorder %s110, %s113
      %p119 = scmp.eq.s32.totalorder %s27, 0
      %p120 = por %p118, %p119
      %p121 = scmp.ne.s32.totalorder %s110, %s113
      %p122 = scmp.eq.s32.totalorder %s32, 1
      %p123 = por %p121, %p122
      %p124 = scmp.ne.s32.totalorder %s113, %s114
      %p125 = scmp.eq.s32.totalorder %s32, 0
      %p126 = por %p124, %p125
      %p127 = scmp.ne.s32.totalorder %s113, %s114
      %p128 = scmp.eq.s32.totalorder %s33, 1
      %p129 = por %p127, %p128
      %p131 = scmp.ne.s32.totalorder %s114, %s130
      %p132 = scmp.eq.s32.totalorder %s33, 0
      %p133 = por %p131, %p132
      %s134 = ssub.s32 %s27, %s34
      %p135 = scmp.eq.s32.totalorder %s134, 0
      %s137 = sadd.s32 %s136, 1
      %s138 = scalar_select %p135, %s136, %s137
      %p141 = pneg %p135
      %p142 = scmp.eq.s32.totalorder %s27, 1
      %p143 = por %p141, %p142
      %p144 = scmp.ne.s32.totalorder %s136, %s139
      %p145 = scmp.eq.s32.totalorder %s27, 0
      %p146 = por %p144, %p145
      %p147 = scmp.ne.s32.totalorder %s136, %s139
      %p148 = scmp.eq.s32.totalorder %s32, 1
      %p149 = por %p147, %p148
      %p150 = scmp.ne.s32.totalorder %s139, %s140
      %p151 = scmp.eq.s32.totalorder %s32, 0
      %p152 = por %p150, %p151
      %p153 = scmp.ne.s32.totalorder %s139, %s140
      %p154 = scmp.eq.s32.totalorder %s33, 1
      %p155 = por %p153, %p154
      %p157 = scmp.ne.s32.totalorder %s140, %s156
      %p158 = scmp.eq.s32.totalorder %s33, 0
      %p159 = por %p157, %p158
      %s161 = sadd.s32 %s160, 1
      %p164 = scmp.eq.s32.totalorder %s27, 1
      %p165 = scmp.ne.s32.totalorder %s160, %s162
      %p166 = scmp.eq.s32.totalorder %s27, 0
      %p167 = por %p165, %p166
      %p168 = scmp.ne.s32.totalorder %s160, %s162
      %p169 = scmp.eq.s32.totalorder %s32, 1
      %p170 = por %p168, %p169
      %p171 = scmp.ne.s32.totalorder %s162, %s163
      %p172 = scmp.eq.s32.totalorder %s32, 0
      %p173 = por %p171, %p172
      %p174 = scmp.ne.s32.totalorder %s162, %s163
      %p175 = scmp.eq.s32.totalorder %s33, 1
      %p176 = por %p174, %p175
      %p178 = scmp.ne.s32.totalorder %s163, %s177
      %p179 = scmp.eq.s32.totalorder %s33, 0
      %p180 = por %p178, %p179
      %s182 = sadd.s32 %s181, 1
      %p185 = scmp.eq.s32.totalorder %s27, 1
      %p186 = scmp.ne.s32.totalorder %s181, %s183
      %p187 = scmp.eq.s32.totalorder %s27, 0
      %p188 = por %p186, %p187
      %p189 = scmp.ne.s32.totalorder %s181, %s183
      %p190 = scmp.eq.s32.totalorder %s32, 1
      %p191 = por %p189, %p190
      %p192 = scmp.ne.s32.totalorder %s183, %s184
      %p193 = scmp.eq.s32.totalorder %s32, 0
      %p194 = por %p192, %p193
      %p195 = scmp.ne.s32.totalorder %s183, %s184
      %p196 = scmp.eq.s32.totalorder %s33, 1
      %p197 = por %p195, %p196
      %p199 = scmp.ne.s32.totalorder %s184, %s198
      %p200 = scmp.eq.s32.totalorder %s33, 0
      %p201 = por %p199, %p200
      %s202 = ssub.s32 %s27, %s34
      %p203 = scmp.eq.s32.totalorder %s202, 0
      %s205 = sadd.s32 %s204, 1
      %s206 = scalar_select %p203, %s204, %s205
      %p209 = pneg %p203
      %p210 = scmp.eq.s32.totalorder %s27, 1
      %p211 = por %p209, %p210
      %p212 = scmp.ne.s32.totalorder %s204, %s207
      %p213 = scmp.eq.s32.totalorder %s27, 0
      %p214 = por %p212, %p213
      %p215 = scmp.ne.s32.totalorder %s204, %s207
      %p216 = scmp.eq.s32.totalorder %s32, 1
      %p217 = por %p215, %p216
      %p218 = scmp.ne.s32.totalorder %s207, %s208
      %p219 = scmp.eq.s32.totalorder %s32, 0
      %p220 = por %p218, %p219
      %p221 = scmp.ne.s32.totalorder %s207, %s208
      %p222 = scmp.eq.s32.totalorder %s33, 1
      %p223 = por %p221, %p222
      %p225 = scmp.ne.s32.totalorder %s208, %s224
      %p226 = scmp.eq.s32.totalorder %s33, 0
      %p227 = por %p225, %p226
      %p228 = scmp.le.s32.totalorder 1, %s27
      %p229 = scmp.lt.s32.totalorder %s27, 3
      %p230 = pnand %p228, %p229
      %p231 = pneg %p230
      // Predicated region
      $region9: #{tpu_custom_call.1} parent=5 // pred_check
        _
      $region10: #{tpu_custom_call.1} parent=5 // pred_check_branch
        %233 = sbr.rel (%p230) target = $region12
      $region11: #{tpu_custom_call.1} parent=5 // pred_region
        %s234 = ssub.s32 %s27, 1
        // Predicated region
        $region13: #{tpu_custom_call.1} parent=11 // pred_check
          %p235 = pneg %p48
        $region14: #{tpu_custom_call.1} parent=11 // pred_check_branch
          %237 = sbr.rel (%p235) target = $region16
        $region15: #{tpu_custom_call.1} parent=11 // pred_region
          %239 = vsyncadd [#allocation5], 0
          %s241 = sshll.u32 %s0, 4
          %s242 = int_to_ptr.hbm [resolvable:$true] %s241
          %244 = dma.hbm_to_smem %s242, 16, [#allocation2], [#allocation5]
        $region16: #{tpu_custom_call.1} parent=11 // pred_fallthru
          _
        // Predicated region
        $region17: #{tpu_custom_call.1} parent=11 // pred_check
          %p245 = pneg %p173
        $region18: #{tpu_custom_call.1} parent=11 // pred_check_branch
          %247 = sbr.rel (%p245) target = $region20
        $region19: #{tpu_custom_call.1} parent=11 // pred_region
          %249 = vsyncadd [#allocation11], 0
          %s250 = sshll.u32 %s5, 4
          %s251 = int_to_ptr.hbm [resolvable:$true] %s250
          %s252 = sshll.u32 [#allocation12], 4
          %s253 = int_to_ptr.vmem [resolvable:$true] %s252
          %258 = dma.hbm_to_vmem [thread:$0]  %s251, 1024, %s253, [#allocation11], 64, 64, 4
        $region20: #{tpu_custom_call.1} parent=11 // pred_fallthru
          _
        // Predicated region
        $region21: #{tpu_custom_call.1} parent=11 // pred_check
          %p259 = pneg %p194
        $region22: #{tpu_custom_call.1} parent=11 // pred_check_branch
          %261 = sbr.rel (%p259) target = $region24
        $region23: #{tpu_custom_call.1} parent=11 // pred_region
          %263 = vsyncadd [#allocation14], 0
          %s264 = sshll.u32 %s6, 4
          %s265 = int_to_ptr.hbm [resolvable:$true] %s264
          %s266 = sshll.u32 [#allocation13], 4
          %s267 = int_to_ptr.vmem [resolvable:$true] %s266
          %272 = dma.hbm_to_vmem [thread:$0]  %s265, 2048, %s267, [#allocation14], 128, 128, 8
        $region24: #{tpu_custom_call.1} parent=11 // pred_fallthru
          _
      $region12: #{tpu_custom_call.1} parent=5 // pred_fallthru
        _
      %p273 = scmp.lt.s32.totalorder %s27, 2
      // Predicated region
      $region25: #{tpu_custom_call.1} parent=5 // pred_check
        %p274 = pneg %p273
      $region26: #{tpu_custom_call.1} parent=5 // pred_check_branch
        %276 = sbr.rel (%p274) target = $region28
      $region27: #{tpu_custom_call.1} parent=5 // pred_region
        // Predicated region
        $region29: #{tpu_custom_call.1} parent=27 // pred_check
          %p277 = pneg %p68
        $region30: #{tpu_custom_call.1} parent=27 // pred_check_branch
          %279 = sbr.rel (%p277) target = $region32
        $region31: #{tpu_custom_call.1} parent=27 // pred_region
          %s280 = sand.u32 %s58, 1
          %s281 = scalar_lea.sflag [#allocation3], %s280
          %s282 = sand.u32 %s58, 1
          %s283 = smul.addr %s282, 8
          %s284 = scalar_lea.vmem [#allocation6], %s283
          %286 = vsyncadd %s281, 0
          %s287 = smul.addr %s27, 8
          %s288 = scalar_lea.hbm %s1, %s287
          %s290 = sshll.u32 %s288, 4
          %s291 = int_to_ptr.hbm [resolvable:$true] %s290
          %s292 = sshll.u32 %s284, 4
          %s293 = int_to_ptr.vmem [resolvable:$true] %s292
          %295 = dma.hbm_to_vmem [thread:$0]  %s291, 128, %s293, %s281
        $region32: #{tpu_custom_call.1} parent=27 // pred_fallthru
          _
        // Predicated region
        $region33: #{tpu_custom_call.1} parent=27 // pred_check
          %p296 = pneg %p94
        $region34: #{tpu_custom_call.1} parent=27 // pred_check_branch
          %298 = sbr.rel (%p296) target = $region36
        $region35: #{tpu_custom_call.1} parent=27 // pred_region
          %s299 = sand.u32 %s27, 1
          %s300 = scalar_lea.sflag [#allocation8], %s299
          %s301 = sand.u32 %s84, 1
          %s302 = smul.addr %s301, 8
          %s303 = scalar_lea.vmem [#allocation7], %s302
          %305 = vsyncadd %s300, 0
          %s306 = smul.addr %s27, 8
          %s307 = scalar_lea.hbm %s2, %s306
          %s309 = sshll.u32 %s307, 4
          %s310 = int_to_ptr.hbm [resolvable:$true] %s309
          %s311 = sshll.u32 %s303, 4
          %s312 = int_to_ptr.vmem [resolvable:$true] %s311
          %314 = dma.hbm_to_vmem [thread:$0]  %s310, 128, %s312, %s300
        $region36: #{tpu_custom_call.1} parent=27 // pred_fallthru
          _
        // Predicated region
        $region37: #{tpu_custom_call.1} parent=27 // pred_check
          %p315 = pneg %p120
        $region38: #{tpu_custom_call.1} parent=27 // pred_check_branch
          %317 = sbr.rel (%p315) target = $region40
        $region39: #{tpu_custom_call.1} parent=27 // pred_region
          %s318 = sand.u32 %s27, 1
          %s319 = scalar_lea.sflag [#allocation8], %s318
          %s320 = sand.u32 %s110, 1
          %s321 = smul.addr %s320, 8
          %s322 = scalar_lea.vmem [#allocation9], %s321
          %324 = vsyncadd %s319, 0
          %s325 = smul.addr %s27, 8
          %s326 = scalar_lea.hbm %s3, %s325
          %s328 = sshll.u32 %s326, 4
          %s329 = int_to_ptr.hbm [resolvable:$true] %s328
          %s330 = sshll.u32 %s322, 4
          %s331 = int_to_ptr.vmem [resolvable:$true] %s330
          %333 = dma.hbm_to_vmem [thread:$0]  %s329, 128, %s331, %s319
        $region40: #{tpu_custom_call.1} parent=27 // pred_fallthru
          _
        // Predicated region
        $region41: #{tpu_custom_call.1} parent=27 // pred_check
          %p334 = pneg %p146
        $region42: #{tpu_custom_call.1} parent=27 // pred_check_branch
          %336 = sbr.rel (%p334) target = $region44
        $region43: #{tpu_custom_call.1} parent=27 // pred_region
          %s337 = sand.u32 %s27, 1
          %s338 = scalar_lea.sflag [#allocation11], %s337
          %s339 = sand.u32 %s136, 1
          %s340 = smul.addr %s339, 8
          %s341 = scalar_lea.vmem [#allocation10], %s340
          %343 = vsyncadd %s338, 0
          %s344 = smul.addr %s27, 2
          %s345 = smul.addr %s344, 4
          %s346 = scalar_lea.hbm %s4, %s345
          %s347 = sshll.u32 %s346, 4
          %s348 = int_to_ptr.hbm [resolvable:$true] %s347
          %s349 = sshll.u32 %s341, 4
          %s350 = int_to_ptr.vmem [resolvable:$true] %s349
          %355 = dma.hbm_to_vmem [thread:$0]  %s348, 128, %s350, %s338, 64, 64, 4
        $region44: #{tpu_custom_call.1} parent=27 // pred_fallthru
          _
      $region28: #{tpu_custom_call.1} parent=5 // pred_fallthru
        _
      %p356 = scmp.le.s32.totalorder 1, %s27
      %p357 = scmp.lt.s32.totalorder %s27, 3
      %p358 = pnand %p356, %p357
      %p359 = pneg %p358
      // Predicated region
      $region45: #{tpu_custom_call.1} parent=5 // pred_check
        _
      $region46: #{tpu_custom_call.1} parent=5 // pred_check_branch
        %361 = sbr.rel (%p358) target = $region48
      $region47: #{tpu_custom_call.1} parent=5 // pred_region
        %s362 = ssub.s32 %s27, 1
        // Predicated region
        $region49: #{tpu_custom_call.1} parent=47 // pred_check
          %p363 = pneg %p48
        $region50: #{tpu_custom_call.1} parent=47 // pred_check_branch
          %365 = sbr.rel (%p363) target = $region52
        $region51: #{tpu_custom_call.1} parent=47 // pred_region
          %367 = dma.done [#allocation5], 16
        $region52: #{tpu_custom_call.1} parent=47 // pred_fallthru
          _
        %s368 = sand.u32 %s61, 1
        %s369 = scalar_lea.sflag [#allocation3], %s368
        %s370 = sand.u32 %s61, 1
        %s371 = smul.addr %s370, 8
        %s372 = scalar_lea.vmem [#allocation6], %s371
        // Predicated region
        $region53: #{tpu_custom_call.1} parent=47 // pred_check
          %p373 = pneg %p74
        $region54: #{tpu_custom_call.1} parent=47 // pred_check_branch
          %375 = sbr.rel (%p373) target = $region56
        $region55: #{tpu_custom_call.1} parent=47 // pred_region
          %377 = dma.done %s369, 128
        $region56: #{tpu_custom_call.1} parent=47 // pred_fallthru
          _
        %s378 = sand.u32 %s32, 1
        %s379 = scalar_lea.sflag [#allocation8], %s378
        %s380 = sand.u32 %s87, 1
        %s381 = smul.addr %s380, 8
        %s382 = scalar_lea.vmem [#allocation7], %s381
        // Predicated region
        $region57: #{tpu_custom_call.1} parent=47 // pred_check
          %p383 = pneg %p100
        $region58: #{tpu_custom_call.1} parent=47 // pred_check_branch
          %385 = sbr.rel (%p383) target = $region60
        $region59: #{tpu_custom_call.1} parent=47 // pred_region
          %387 = dma.done %s379, 128
        $region60: #{tpu_custom_call.1} parent=47 // pred_fallthru
          _
        %s388 = sand.u32 %s32, 1
        %s389 = scalar_lea.sflag [#allocation8], %s388
        %s390 = sand.u32 %s113, 1
        %s391 = smul.addr %s390, 8
        %s392 = scalar_lea.vmem [#allocation9], %s391
        // Predicated region
        $region61: #{tpu_custom_call.1} parent=47 // pred_check
          %p393 = pneg %p126
        $region62: #{tpu_custom_call.1} parent=47 // pred_check_branch
          %395 = sbr.rel (%p393) target = $region64
        $region63: #{tpu_custom_call.1} parent=47 // pred_region
          %397 = dma.done %s389, 128
        $region64: #{tpu_custom_call.1} parent=47 // pred_fallthru
          _
        %s398 = sand.u32 %s32, 1
        %s399 = scalar_lea.sflag [#allocation11], %s398
        %s400 = sand.u32 %s139, 1
        %s401 = smul.addr %s400, 8
        %s402 = scalar_lea.vmem [#allocation10], %s401
        // Predicated region
        $region65: #{tpu_custom_call.1} parent=47 // pred_check
          %p403 = pneg %p152
        $region66: #{tpu_custom_call.1} parent=47 // pred_check_branch
          %405 = sbr.rel (%p403) target = $region68
        $region67: #{tpu_custom_call.1} parent=47 // pred_region
          %407 = dma.done %s399, 128
        $region68: #{tpu_custom_call.1} parent=47 // pred_fallthru
          _
        // Predicated region
        $region69: #{tpu_custom_call.1} parent=47 // pred_check
          %p408 = pneg %p173
        $region70: #{tpu_custom_call.1} parent=47 // pred_check_branch
          %410 = sbr.rel (%p408) target = $region72
        $region71: #{tpu_custom_call.1} parent=47 // pred_region
          %412 = dma.done [#allocation11], 1024
        $region72: #{tpu_custom_call.1} parent=47 // pred_fallthru
          _
        // Predicated region
        $region73: #{tpu_custom_call.1} parent=47 // pred_check
          %p413 = pneg %p194
        $region74: #{tpu_custom_call.1} parent=47 // pred_check_branch
          %415 = sbr.rel (%p413) target = $region76
        $region75: #{tpu_custom_call.1} parent=47 // pred_region
          %417 = dma.done [#allocation14], 2048
        $region76: #{tpu_custom_call.1} parent=47 // pred_fallthru
          _
        %418 = sfence
        %p419 = pneg %p48
        %p420 = pneg %p45
        %s421 = sand.u32 %s61, 1
        %s422 = scalar_lea.sflag [#allocation3], %s421
        %s423 = sand.u32 %s61, 1
        %s424 = smul.addr %s423, 8
        %s425 = scalar_lea.vmem [#allocation6], %s424
        %p426 = pneg %p74
        %p427 = pneg %p71
        %s428 = sand.u32 %s32, 1
        %s429 = scalar_lea.sflag [#allocation8], %s428
        %s430 = sand.u32 %s87, 1
        %s431 = smul.addr %s430, 8
        %s432 = scalar_lea.vmem [#allocation7], %s431
        %p433 = pneg %p100
        %p434 = pneg %p97
        %s435 = sand.u32 %s32, 1
        %s436 = scalar_lea.sflag [#allocation8], %s435
        %s437 = sand.u32 %s113, 1
        %s438 = smul.addr %s437, 8
        %s439 = scalar_lea.vmem [#allocation9], %s438
        %p440 = pneg %p126
        %p441 = pneg %p123
        %s442 = sand.u32 %s32, 1
        %s443 = scalar_lea.sflag [#allocation11], %s442
        %s444 = sand.u32 %s139, 1
        %s445 = smul.addr %s444, 8
        %s446 = scalar_lea.vmem [#allocation10], %s445
        %p447 = pneg %p152
        %p448 = pneg %p149
        %p449 = pneg %p173
        %p450 = pneg %p170
        %p451 = pneg %p194
        %p452 = pneg %p191
        %p453 = pneg %p220
        %p454 = pneg %p217
        %s455 = sand.u32 %s207, 1
        %s456 = scalar_lea.sflag [#allocation4], %s455
        %s457 = sand.u32 %s207, 1
        %s458 = smul.addr %s457, 8
        %s459 = scalar_lea.vmem [#allocation15], %s458
        %s461 = sld [smem:[#allocation2]]
        %s462 = sld [smem:[#allocation2 + $0x1]]
        %s463 = sld [smem:[#allocation2 + $0x2]]
        %v464 = vld [vmem:[%s382] sm:$0xff]
        %v465 = vld [vmem:[%s392] sm:$0xff]
        %v466 = vld [vmem:[%s402] sm:$0xf]
        %v467 = vld [vmem:[%s402 + $0x4] sm:$0xf]
        %v468 = vld [vmem:[%s372] sm:$0xff]
        %v469 = vpack.c.bf16 %v468, %v468
        %v470 = vld [vmem:[#allocation12] sm:$0xf]
        %v471 = vld [vmem:[#allocation12 + $0x4] sm:$0xf]
        %v472 = vld [vmem:[#allocation12 + $0x8] sm:$0xf]
        %v473 = vld [vmem:[#allocation12 + $0xc] sm:$0xf]
        %v474 = vld [vmem:[#allocation12 + $0x10] sm:$0xf]
        %v475 = vld [vmem:[#allocation12 + $0x14] sm:$0xf]
        %v476 = vld [vmem:[#allocation12 + $0x18] sm:$0xf]
        %v477 = vld [vmem:[#allocation12 + $0x1c] sm:$0xf]
        %v478 = vld [vmem:[#allocation12 + $0x20] sm:$0xf]
        %v479 = vld [vmem:[#allocation12 + $0x24] sm:$0xf]
        %v480 = vld [vmem:[#allocation12 + $0x28] sm:$0xf]
        %v481 = vld [vmem:[#allocation12 + $0x2c] sm:$0xf]
        %v482 = vld [vmem:[#allocation12 + $0x30] sm:$0xf]
        %v483 = vld [vmem:[#allocation12 + $0x34] sm:$0xf]
        %v484 = vld [vmem:[#allocation12 + $0x38] sm:$0xf]
        %v485 = vld [vmem:[#allocation12 + $0x3c] sm:$0xf]
        %v502 = vunpack.c.l.b16 %v470
        %v503 = vunpack.c.l.b16 %v471
        %v504 = vunpack.c.l.b16 %v472
        %v505 = vunpack.c.l.b16 %v473
        %v506 = vunpack.c.l.b16 %v474
        %v507 = vunpack.c.l.b16 %v475
        %v508 = vunpack.c.l.b16 %v476
        %v509 = vunpack.c.l.b16 %v477
        %v510 = vunpack.c.l.b16 %v478
        %v511 = vunpack.c.l.b16 %v479
        %v512 = vunpack.c.l.b16 %v480
        %v513 = vunpack.c.l.b16 %v481
        %v514 = vunpack.c.l.b16 %v482
        %v515 = vunpack.c.l.b16 %v483
        %v516 = vunpack.c.l.b16 %v484
        %v517 = vunpack.c.l.b16 %v485
        %v518 = vpack.c.b16 %v503, %v502
        %v519 = vpack.c.b16 %v505, %v504
        %v520 = vpack.c.b16 %v507, %v506
        %v521 = vpack.c.b16 %v509, %v508
        %v522 = vpack.c.b16 %v511, %v510
        %v523 = vpack.c.b16 %v513, %v512
        %v524 = vpack.c.b16 %v515, %v514
        %v525 = vpack.c.b16 %v517, %v516
        %534 = vmatpush.bf16.msra.mxu0 %v525
        %535 = vmatpush.bf16.msra.mxu0 %v524
        %536 = vmatpush.bf16.msra.mxu0 %v523
        %537 = vmatpush.bf16.msra.mxu0 %v522
        %538 = vmatpush.bf16.msra.mxu0 %v521
        %539 = vmatpush.bf16.msra.mxu0 %v520
        %540 = vmatpush.bf16.msra.mxu0 %v519
        %541 = vmatpush.bf16.msra.mxu0 %v518
        %542 = vmatmul.bf16.gmra.mxu0 %v469
        %v543 = vpop.f32.mrf.mxu0
        %v544 = vadd.f32 0.0, %v543
        %v545 = vpop.f32.mrf.mxu0
        %546 = vdwg.mxu0
        %v547 = vxor.u32 %v544, 2147483648
        %v548 = vmul.f32 %v547, 1.442695
        %v549 = vpow.pop %v548
        %v550 = vadd.f32 %v549, 1.0
        %v551 = vrcp.pop %v550
        %v552 = vmul.f32 %v550, %v551
        %v553 = vsub.f32 1.0, %v552
        %v554 = vmul.f32 %v551, %v553
        %v555 = vadd.f32 %v551, %v554
        %vm556 = vweird.f32 %v550
        %vm557 = vweird.f32 %v551
        %vm558 = vmor %vm556, %vm557
        %v559 = vsel %vm558, %v551, %v555
        %v560 = vand.u32 2147483647, %v550
        %vm561 = vcmp.eq.f32.partialorder %v560, 8.507059e+37
        %v562 = vand.u32 %v550, 2147483648
        %v563 = vor.u32 1.1754944e-38, %v562
        %v564 = vsel %vm561, %v563, %v559
        %v565 = vmul.f32 1.0, %v564
        %v566 = vld [vmem:[#allocation13] sm:$0xff]
        %v567 = vld [vmem:[#allocation13 + $0x8] sm:$0xff]
        %v568 = vld [vmem:[#allocation13 + $0x10] sm:$0xff]
        %v569 = vld [vmem:[#allocation13 + $0x18] sm:$0xff]
        %v570 = vld [vmem:[#allocation13 + $0x20] sm:$0xff]
        %v571 = vld [vmem:[#allocation13 + $0x28] sm:$0xff]
        %v572 = vld [vmem:[#allocation13 + $0x30] sm:$0xff]
        %v573 = vld [vmem:[#allocation13 + $0x38] sm:$0xff]
        %v574 = vld [vmem:[#allocation13 + $0x40] sm:$0xff]
        %v575 = vld [vmem:[#allocation13 + $0x48] sm:$0xff]
        %v576 = vld [vmem:[#allocation13 + $0x50] sm:$0xff]
        %v577 = vld [vmem:[#allocation13 + $0x58] sm:$0xff]
        %v578 = vld [vmem:[#allocation13 + $0x60] sm:$0xff]
        %v579 = vld [vmem:[#allocation13 + $0x68] sm:$0xff]
        %v580 = vld [vmem:[#allocation13 + $0x70] sm:$0xff]
        %v581 = vld [vmem:[#allocation13 + $0x78] sm:$0xff]
        %v584 = vunpack.c.l.b16 %v466
        %v585 = vunpack.c.l.b16 %v467
        %v586 = vpack.c.b16 %v585, %v584
        %v604 = vunpack.c.l.b16 %v566
        %v605 = vunpack.c.h.b16 %v566
        %v606 = vunpack.c.l.b16 %v567
        %v607 = vunpack.c.h.b16 %v567
        %v608 = vunpack.c.l.b16 %v568
        %v609 = vunpack.c.h.b16 %v568
        %v610 = vunpack.c.l.b16 %v569
        %v611 = vunpack.c.h.b16 %v569
        %v612 = vunpack.c.l.b16 %v570
        %v613 = vunpack.c.h.b16 %v570
        %v614 = vunpack.c.l.b16 %v571
        %v615 = vunpack.c.h.b16 %v571
        %v616 = vunpack.c.l.b16 %v572
        %v617 = vunpack.c.h.b16 %v572
        %v618 = vunpack.c.l.b16 %v573
        %v619 = vunpack.c.h.b16 %v573
        %v620 = vunpack.c.l.b16 %v574
        %v621 = vunpack.c.h.b16 %v574
        %v622 = vunpack.c.l.b16 %v575
        %v623 = vunpack.c.h.b16 %v575
        %v624 = vunpack.c.l.b16 %v576
        %v625 = vunpack.c.h.b16 %v576
        %v626 = vunpack.c.l.b16 %v577
        %v627 = vunpack.c.h.b16 %v577
        %v628 = vunpack.c.l.b16 %v578
        %v629 = vunpack.c.h.b16 %v578
        %v630 = vunpack.c.l.b16 %v579
        %v631 = vunpack.c.h.b16 %v579
        %v632 = vunpack.c.l.b16 %v580
        %v633 = vunpack.c.h.b16 %v580
        %v634 = vunpack.c.l.b16 %v581
        %v635 = vunpack.c.h.b16 %v581
        %v636 = vpack.c.b16 %v606, %v604
        %v637 = vpack.c.b16 %v607, %v605
        %v638 = vpack.c.b16 %v610, %v608
        %v639 = vpack.c.b16 %v611, %v609
        %v640 = vpack.c.b16 %v614, %v612
        %v641 = vpack.c.b16 %v615, %v613
        %v642 = vpack.c.b16 %v618, %v616
        %v643 = vpack.c.b16 %v619, %v617
        %v644 = vpack.c.b16 %v622, %v620
        %v645 = vpack.c.b16 %v623, %v621
        %v646 = vpack.c.b16 %v626, %v624
        %v647 = vpack.c.b16 %v627, %v625
        %v648 = vpack.c.b16 %v630, %v628
        %v649 = vpack.c.b16 %v631, %v629
        %v650 = vpack.c.b16 %v634, %v632
        %v651 = vpack.c.b16 %v635, %v633
        %668 = vmatpush.bf16.msra.mxu0 %v650
        %669 = vmatpush.bf16.msra.mxu0 %v648
        %670 = vmatpush.bf16.msra.mxu0 %v646
        %671 = vmatpush.bf16.msra.mxu0 %v644
        %672 = vmatpush.bf16.msra.mxu0 %v642
        %673 = vmatpush.bf16.msra.mxu0 %v640
        %674 = vmatpush.bf16.msra.mxu0 %v638
        %675 = vmatpush.bf16.msra.mxu0 %v636
        %676 = vmatmul.bf16.gmra.mxu0 %v586
        %v677 = vpop.f32.mrf.mxu0
        %v678 = vadd.f32 0.0, %v677
        %v679 = vpop.f32.mrf.mxu0
        %v680 = vadd.f32 0.0, %v679
        %681 = vdwg.mxu0
        %682 = vmatpush.bf16.msra.mxu0 %v651
        %683 = vmatpush.bf16.msra.mxu0 %v649
        %684 = vmatpush.bf16.msra.mxu0 %v647
        %685 = vmatpush.bf16.msra.mxu0 %v645
        %686 = vmatpush.bf16.msra.mxu0 %v643
        %687 = vmatpush.bf16.msra.mxu0 %v641
        %688 = vmatpush.bf16.msra.mxu0 %v639
        %689 = vmatpush.bf16.msra.mxu0 %v637
        %690 = vmatmul.bf16.gmra.mxu0 %v586
        %v691 = vpop.f32.mrf.mxu0
        %v692 = vadd.f32 0.0, %v691
        %v693 = vpop.f32.mrf.mxu0
        %v694 = vadd.f32 0.0, %v693
        %695 = vdwg.mxu0
        %v696 = vmul.f32 %v678, 1.442695
        %v697 = vpow.pop %v696
        %v698 = vmul.f32 %v680, 1.442695
        %v699 = vpow.pop %v698
        %s700 = smul.f32 %s461, %s462
        %v701 = vstv %s700
        %v702 = vmul.f32 %v701, %v464
        %v703 = vadd.f32 %v702, %v465
        %v704 = vmul.f32 %v703, 1.442695
        %v705 = vpow.pop %v704
        %v706 = vpack.c.bf16 %v705, %v705
        %v707 = vmul.f32 %v697, %v692
        %v708 = vmul.f32 %v699, %v694
        %v709 = vpack.c.bf16 %v707, %v707
        %v710 = vpack.c.bf16 %v708, %v708
        %v713 = vunpack.c.l.b16 %v709
        %v714 = vunpack.c.l.b16 %v710
        %v715 = vpack.c.b16 %v714, %v713
        %vm717 = vcmask 130048
        %v719 = vsel %vm717, %v706, 0
        %721 = vmatpush.bf16.msra.mxu0 0
        %722 = vmatpush.bf16.msra.mxu0 0
        %723 = vmatpush.bf16.msra.mxu0 0
        %724 = vmatpush.bf16.msra.mxu0 0
        %725 = vmatpush.bf16.msra.mxu0 0
        %726 = vmatpush.bf16.msra.mxu0 0
        %727 = vmatpush.bf16.msra.mxu0 0
        %728 = vmatpush.bf16.msra.mxu0 %v715
        %729 = vmatmul.bf16.gmra.mxu0 %v719
        %v730 = vpop.f32.mrf.mxu0
        %v731 = vadd.f32 0.0, %v730
        %v732 = vpop.f32.mrf.mxu0
        %733 = vdwg.mxu0
        %v734 = vpack.c.bf16 %v697, %v697
        %v735 = vpack.c.bf16 %v699, %v699
        %v738 = vunpack.c.l.b16 %v734
        %v739 = vunpack.c.l.b16 %v735
        %v740 = vpack.c.b16 %v739, %v738
        %742 = vmatpush.bf16.msra.mxu0 0
        %743 = vmatpush.bf16.msra.mxu0 0
        %744 = vmatpush.bf16.msra.mxu0 0
        %745 = vmatpush.bf16.msra.mxu0 0
        %746 = vmatpush.bf16.msra.mxu0 0
        %747 = vmatpush.bf16.msra.mxu0 0
        %748 = vmatpush.bf16.msra.mxu0 0
        %749 = vmatpush.bf16.msra.mxu0 %v740
        %750 = vmatmul.bf16.gmra.mxu0 %v719
        %v751 = vpop.f32.mrf.mxu0
        %v752 = vadd.f32 0.0, %v751
        %v753 = vpop.f32.mrf.mxu0
        %754 = vdwg.mxu0
        %v755 = vrcp.pop %v752
        %vm756 = vcmp.eq.f32.partialorder %v752, 0.0
        %v757 = vmul.f32 %v731, %v755
        %v758 = vsel %vm756, 0.0, %v757
        %v759 = vmul.f32 %v565, %v758
        %v760 = vpack.c.bf16 %v759, %v759
        %761 = vmatpush.bf16.xpose.msra.mxu0 0
        %762 = vmatpush.bf16.xpose.msra.mxu0 0
        %763 = vmatpush.bf16.xpose.msra.mxu0 0
        %764 = vmatpush.bf16.xpose.msra.mxu0 0
        %765 = vmatpush.bf16.xpose.msra.mxu0 0
        %766 = vmatpush.bf16.xpose.msra.mxu0 0
        %767 = vmatpush.bf16.xpose.msra.mxu0 0
        %768 = vmatpush.bf16.xpose.msra.mxu0 %v586
        %769 = vmatmul.bf16.gmra.mxu0 %v760
        %v770 = vpop.f32.mrf.mxu0
        %v771 = vadd.f32 0.0, %v770
        %v772 = vpop.f32.mrf.mxu0
        %773 = vdwg.mxu0
        %v774 = vsel %vm717, %v771, 0.0
        %v775 = vmul.f32 %v774, 0.17677669
        %s776 = smul.f32 %s461, %s463
        %v777 = vstv %s776
        %v778 = vmul.f32 %v777, %v464
        %v779 = vadd.f32 %v775, %v778
        %v780 = vtanh.pop %v779
        %v781 = vmul.f32 %v780, 10.0
        %v782 = vadd.f32 %v781, %v465
        %783 = vmax.xlane.f32.xlu0 %v782
        %v784 = vpop.xlane.xlu0 %783
        %v785 = vsub.f32 %v782, %v784
        %v786 = vmul.f32 %v785, 1.442695
        %v787 = vpow.pop %v786
        %788 = vadd.xlane.f32.xlu0 %v787
        %v789 = vpop.xlane.xlu0 %788
        %v790 = vrcp.pop %v789
        %v791 = vmul.f32 %v789, %v790
        %v792 = vsub.f32 1.0, %v791
        %v793 = vmul.f32 %v790, %v792
        %v794 = vadd.f32 %v790, %v793
        %vm795 = vweird.f32 %v789
        %vm796 = vweird.f32 %v790
        %vm797 = vmor %vm795, %vm796
        %v798 = vsel %vm797, %v790, %v794
        %v799 = vand.u32 2147483647, %v789
        %vm800 = vcmp.eq.f32.partialorder %v799, 8.507059e+37
        %v801 = vand.u32 %v789, 2147483648
        %v802 = vor.u32 1.1754944e-38, %v801
        %v803 = vsel %vm800, %v802, %v798
        %v804 = vmul.f32 %v787, %v803
        %805 = vst [vmem:[%s459] sm:$0xff] %v804
        %s806 = sand.u32 %s207, 1
        %s807 = scalar_lea.sflag [#allocation4], %s806
        %s808 = sand.u32 %s207, 1
        %s809 = smul.addr %s808, 8
        %s810 = scalar_lea.vmem [#allocation15], %s809
        // Predicated region
        $region77: #{tpu_custom_call.1} parent=47 // pred_check
          %p811 = pneg %p217
        $region78: #{tpu_custom_call.1} parent=47 // pred_check_branch
          %813 = sbr.rel (%p811) target = $region80
        $region79: #{tpu_custom_call.1} parent=47 // pred_region
          %815 = vsyncadd %s807, 0
          %s816 = smul.addr %s32, 8
          %s817 = scalar_lea.hbm %s7, %s816
          %s819 = sshll.u32 %s810, 4
          %s820 = int_to_ptr.vmem [resolvable:$true] %s819
          %s821 = sshll.u32 %s817, 4
          %s822 = int_to_ptr.hbm [resolvable:$true] %s821
          %824 = dma.vmem_to_hbm [thread:$0]  %s820, 128, %s822, %s807
        $region80: #{tpu_custom_call.1} parent=47 // pred_fallthru
          _
      $region48: #{tpu_custom_call.1} parent=5 // pred_fallthru
        _
      %p825 = scmp.le.s32.totalorder 2, %s27
      // Predicated region
      $region81: #{tpu_custom_call.1} parent=5 // pred_check
        %p826 = pneg %p825
      $region82: #{tpu_custom_call.1} parent=5 // pred_check_branch
        %828 = sbr.rel (%p826) target = $region84
      $region83: #{tpu_custom_call.1} parent=5 // pred_region
        %s829 = ssub.s32 %s27, 2
        // Predicated region
        $region85: #{tpu_custom_call.1} parent=83 // pred_check
          %p830 = pneg %p223
        $region86: #{tpu_custom_call.1} parent=83 // pred_check_branch
          %832 = sbr.rel (%p830) target = $region88
        $region87: #{tpu_custom_call.1} parent=83 // pred_region
          %s833 = sand.u32 %s208, 1
          %s834 = scalar_lea.sflag [#allocation4], %s833
          %s835 = sand.u32 %s208, 1
          %s836 = smul.addr %s835, 8
          %s837 = scalar_lea.vmem [#allocation15], %s836
          %839 = dma.done %s834, 128
        $region88: #{tpu_custom_call.1} parent=83 // pred_fallthru
          _
      $region84: #{tpu_custom_call.1} parent=5 // pred_fallthru
        _
    $region6: #{tpu_custom_call.1} parent=1 // loop_footer
      %s31 = sadd.s32 1, %s27
    $region7: #{tpu_custom_call.1} parent=1 // loop_footer_branch
      %26 = sbr.rel target = $region3
    $region8: #{tpu_custom_call.1} parent=1 // loop_exit
      _
    %840 = vsyncpa [#allocation3], 1
    %s841 = scalar_lea.sflag [#allocation3], 1
    %842 = vsyncpa %s841, 1
    %843 = vsyncpa [#allocation8], 1
    %s844 = scalar_lea.sflag [#allocation8], 1
    %845 = vsyncpa %s844, 1
    %846 = vsyncpa [#allocation11], 1
    %s847 = scalar_lea.sflag [#allocation11], 1
    %848 = vsyncpa %s847, 1
    %849 = vsyncpa [#allocation14], 1
    %850 = vsyncpa [#allocation4], 1
    %s851 = scalar_lea.sflag [#allocation4], 1
    %852 = vsyncpa %s851, 1
    %853 = vsyncpa [#allocation5], 1
    %s854 = scalar_lea.sflag [#allocation5], 1
    %855 = vsyncpa %s854, 1

</llo_original>
